<compile_context>
chip_gen: v6e
topology: v6e:2x2x1
jax: 0.10.0
libtpu: 0.0.40
codegen_flags: <defaults>
</compile_context>

<pallas_src>
import jax
import jax.numpy as jnp
from jax.experimental import pallas as pl
from jax.experimental.pallas import tpu as pltpu

_LANES = 128


def _fused_loss_kernel(rank_ref, o1_ref, o2_ref, t_ref, loss_ref, acc_ref):
    """Streaming per-sample L1 diff + fused BxB pairwise ranking loss.

    Grid axis 0 walks the (padded) reduction axis in (B, R_TILE, 128) tiles.
    acc_ref is a resident (B, 128) f32 accumulator holding per-lane partial
    sums of |o2 - t| - |o1 - t|; the lane collapse and the pairwise loss are
    computed only in the last grid step.
    """
    k = pl.program_id(0)

    @pl.when(k == 0)
    def _():
        acc_ref[...] = jnp.zeros_like(acc_ref)

    # Upcast after load; HBM traffic stays at the native dtype width.
    t = t_ref[...].astype(jnp.float32)                        # (B, R_TILE, 128)
    a1 = jnp.abs(o1_ref[...].astype(jnp.float32) - t)
    a2 = jnp.abs(o2_ref[...].astype(jnp.float32) - t)
    # Reduce only the sublane-tiled axis here; defer the 128-lane collapse to
    # the epilogue so the XLU stays off the steady-state loop.
    acc_ref[...] += jnp.sum(a2 - a1, axis=1)                  # (B, 128)

    @pl.when(k == pl.num_programs(0) - 1)
    def _():
        b = acc_ref.shape[0]
        inv_bb = 1.0 / float(b * b)
        # diff[i] = sum|o2_i - t_i| - sum|o1_i - t_i|
        d = jnp.sum(acc_ref[...], axis=1, keepdims=True)      # (B, 1)
        r = rank_ref[...].astype(jnp.float32)                 # (B, 1)

        # Row-broadcast matrices via ones @ x^T (NT dot): row[i, j] = x[j].
        ones_col = jnp.ones((b, 1), jnp.float32)
        nt = (((1,), (1,)), ((), ()))
        d_row = jax.lax.dot_general(ones_col, d, nt,
                                    preferred_element_type=jnp.float32)  # (B,B)
        r_row = jax.lax.dot_general(ones_col, r, nt,
                                    preferred_element_type=jnp.float32)  # (B,B)

        # true_rank[i,j] = sigmoid(1e6 * (diff[j] - diff[i]))
        # pred_rank[i,j] = sigmoid(rank[j] - rank[i])
        true_rank = jax.nn.sigmoid((d_row - d) * 1e6)
        pred_rank = jax.nn.sigmoid(r_row - r)

        sq = (true_rank - pred_rank) ** 2
        total = jnp.sum(jnp.sum(sq, axis=1, keepdims=True), axis=0, keepdims=True)
        loss_ref[...] = total * inv_bb


def _choose_r_tile(b, r_total, itemsize, vmem_budget_bytes):
    """Largest (multiple-of-8) sublane tile keeping 3 inputs x 2 buffers in budget."""
    per_block = max(vmem_budget_bytes // 6, b * _LANES * itemsize * 8)
    r_tile = per_block // (b * _LANES * itemsize)
    r_tile = min(r_tile, max(r_total, 8))
    r_tile = max(8, (r_tile // 8) * 8)
    return int(r_tile)


def custom_loss(rank, output1, output2, targets, *, vmem_budget_bytes=8 * 1024 * 1024):
    b = rank.shape[0]
    o1 = output1.reshape(b, -1)
    o2 = output2.reshape(b, -1)
    tg = targets.reshape(b, -1)
    n = o1.shape[1]

    itemsize = max(jnp.dtype(o1.dtype).itemsize,
                   jnp.dtype(o2.dtype).itemsize,
                   jnp.dtype(tg.dtype).itemsize)
    r_total = -(-n // _LANES)                       # ceil(n / 128)
    r_tile = _choose_r_tile(b, r_total, itemsize, vmem_budget_bytes)
    r_padded = -(-r_total // r_tile) * r_tile       # ceil to multiple of r_tile
    n_padded = r_padded * _LANES

    def prep(x):
        if n_padded != n:
            # Zero padding is exact: |0 - 0| contributes nothing to the L1 sums.
            x = jnp.pad(x, ((0, 0), (0, n_padded - n)))
        return x.reshape(b, r_padded, _LANES)

    o1p, o2p, tgp = prep(o1), prep(o2), prep(tg)
    rank2 = rank.reshape(b, 1)

    grid = (r_padded // r_tile,)

    loss = pl.pallas_call(
        _fused_loss_kernel,
        out_shape=jax.ShapeDtypeStruct((1, 1), jnp.float32),
        grid=grid,
        in_specs=[
            pl.BlockSpec((b, 1), lambda k: (0, 0)),                  # rank (resident)
            pl.BlockSpec((b, r_tile, _LANES), lambda k: (0, k, 0)),  # output1
            pl.BlockSpec((b, r_tile, _LANES), lambda k: (0, k, 0)),  # output2
            pl.BlockSpec((b, r_tile, _LANES), lambda k: (0, k, 0)),  # targets
        ],
        out_specs=pl.BlockSpec((1, 1), lambda k: (0, 0)),
        scratch_shapes=[pltpu.VMEM((b, _LANES), jnp.float32)],
        compiler_params=pltpu.CompilerParams(
            dimension_semantics=("arbitrary",)),
    )(rank2, o1p, o2p, tgp)

    return loss[0, 0]


def _reference_loss(rank, output1, output2, targets):
    """Pure-JAX mirror of the PyTorch forward for validation."""
    b = rank.shape[0]
    s1 = jnp.sum(jnp.abs(output1 - targets).reshape(b, -1), axis=1, keepdims=True)
    s2 = jnp.sum(jnp.abs(output2 - targets).reshape(b, -1), axis=1, keepdims=True)
    diff = s2 - s1
    true_rank = jax.nn.sigmoid((diff.T - diff) * 1e6)
    pred_rank = jax.nn.sigmoid(rank.T - rank)
    return jnp.sum((true_rank - pred_rank) ** 2) / (b * b)


if __name__ == "__main__":
    key = jax.random.PRNGKey(0)
    k1, k2, k3, k4 = jax.random.split(key, 4)

    B, C, H, W = 4, 4, 16, 16
    rank = jax.random.normal(k1, (B, 1), dtype=jnp.float32)
    output1 = jax.random.normal(k2, (B, C, H, W), dtype=jnp.float32)
    output2 = jax.random.normal(k3, (B, C, H, W), dtype=jnp.float32)
    targets = jax.random.normal(k4, (B, C, H, W), dtype=jnp.float32)

    loss = jax.jit(custom_loss)(rank, output1, output2, targets)
    loss = jax.block_until_ready(loss)

    ref = _reference_loss(rank, output1, output2, targets)
    assert jnp.allclose(loss, ref, rtol=1e-5, atol=1e-5), (loss, ref)

    print("KERNEL_OK")
</pallas_src>

<mosaic_0001>
module attributes {stable_mosaic.version = 11 : i64} {
  func.func @_fused_loss_kernel(%arg0: i32, %arg1: memref<4x1xf32, #tpu.memory_space<vmem>>, %arg2: memref<4x8x128xf32, #tpu.memory_space<vmem>>, %arg3: memref<4x8x128xf32, #tpu.memory_space<vmem>>, %arg4: memref<4x8x128xf32, #tpu.memory_space<vmem>>, %arg5: memref<1x1xf32, #tpu.memory_space<vmem>>, %arg6: memref<4x128xf32, #tpu.memory_space<vmem>>) attributes {dimension_semantics = [#tpu.dimension_semantics<arbitrary>], iteration_bounds = array<i64: 1>, scalar_prefetch = 0 : i64, scratch_operands = 1 : i64, tpu.core_type = #tpu.core_type<tc>, window_params = [{pipeline_mode = #tpu.pipeline_mode<synchronous>, transform_indices = @transform_0, window_bounds = array<i64: 4, 1>}, {transform_indices = @transform_1, window_bounds = array<i64: 4, 8, 128>}, {transform_indices = @transform_2, window_bounds = array<i64: 4, 8, 128>}, {transform_indices = @transform_3, window_bounds = array<i64: 4, 8, 128>}, {pipeline_mode = #tpu.pipeline_mode<synchronous>, transform_indices = @transform_4, window_bounds = array<i64: 1, 1>}]} {
    %c0_i32 = arith.constant 0 : i32
    %0 = arith.cmpi eq, %arg0, %c0_i32 : i32
    %1 = arith.extui %0 : i1 to i32
    %c0_i32_0 = arith.constant 0 : i32
    %2 = arith.cmpi ne, %1, %c0_i32_0 : i32
    scf.if %2 {
      %cst_15 = arith.constant 0.000000e+00 : f32
      %18 = vector.broadcast %cst_15 : f32 to vector<4x128xf32>
      %c0_16 = arith.constant 0 : index
      %c0_17 = arith.constant 0 : index
      %19 = vector.load %arg6[%c0_16, %c0_17] : memref<4x128xf32, #tpu.memory_space<vmem>>, vector<4x128xf32>
      tpu.vector_store %arg6[%c0_16, %c0_17], %18 {strides = array<i32>} : memref<4x128xf32, #tpu.memory_space<vmem>>, vector<4x128xf32>,
    } else {
    }
    %c0 = arith.constant 0 : index
    %c0_1 = arith.constant 0 : index
    %c0_2 = arith.constant 0 : index
    %3 = vector.load %arg4[%c0, %c0_1, %c0_2] : memref<4x8x128xf32, #tpu.memory_space<vmem>>, vector<4x8x128xf32>
    %c0_3 = arith.constant 0 : index
    %c0_4 = arith.constant 0 : index
    %c0_5 = arith.constant 0 : index
    %4 = vector.load %arg2[%c0_3, %c0_4, %c0_5] : memref<4x8x128xf32, #tpu.memory_space<vmem>>, vector<4x8x128xf32>
    %5 = arith.subf %4, %3 : vector<4x8x128xf32>
    %6 = math.absf %5 : vector<4x8x128xf32>
    %c0_6 = arith.constant 0 : index
    %c0_7 = arith.constant 0 : index
    %c0_8 = arith.constant 0 : index
    %7 = vector.load %arg3[%c0_6, %c0_7, %c0_8] : memref<4x8x128xf32, #tpu.memory_space<vmem>>, vector<4x8x128xf32>
    %8 = arith.subf %7, %3 : vector<4x8x128xf32>
    %9 = math.absf %8 : vector<4x8x128xf32>
    %c0_9 = arith.constant 0 : index
    %c0_10 = arith.constant 0 : index
    %10 = vector.load %arg6[%c0_9, %c0_10] : memref<4x128xf32, #tpu.memory_space<vmem>>, vector<4x128xf32>
    %11 = arith.subf %9, %6 : vector<4x8x128xf32>
    %cst = arith.constant dense<0.000000e+00> : vector<4x128xf32>
    %12 = vector.multi_reduction <add>, %11, %cst [1] : vector<4x8x128xf32> to vector<4x128xf32>
    %13 = arith.addf %10, %12 : vector<4x128xf32>
    %c0_11 = arith.constant 0 : index
    %c0_12 = arith.constant 0 : index
    %14 = vector.load %arg6[%c0_11, %c0_12] : memref<4x128xf32, #tpu.memory_space<vmem>>, vector<4x128xf32>
    tpu.vector_store %arg6[%c0_11, %c0_12], %13 {strides = array<i32>} : memref<4x128xf32, #tpu.memory_space<vmem>>, vector<4x128xf32>,
    %c0_i32_13 = arith.constant 0 : i32
    %15 = arith.cmpi eq, %arg0, %c0_i32_13 : i32
    %16 = arith.extui %15 : i1 to i32
    %c0_i32_14 = arith.constant 0 : i32
    %17 = arith.cmpi ne, %16, %c0_i32_14 : i32
    scf.if %17 {
      %c0_15 = arith.constant 0 : index
      %c0_16 = arith.constant 0 : index
      %18 = vector.load %arg6[%c0_15, %c0_16] : memref<4x128xf32, #tpu.memory_space<vmem>>, vector<4x128xf32>
      %cst_17 = arith.constant dense<0.000000e+00> : vector<4xf32>
      %19 = vector.multi_reduction <add>, %18, %cst_17 [1] : vector<4x128xf32> to vector<4xf32>
      %20 = vector.shape_cast %19 : vector<4xf32> to vector<4x1xf32>
      %c0_18 = arith.constant 0 : index
      %c0_19 = arith.constant 0 : index
      %21 = vector.load %arg1[%c0_18, %c0_19] : memref<4x1xf32, #tpu.memory_space<vmem>>, vector<4x1xf32>
      %cst_20 = arith.constant 1.000000e+00 : f32
      %22 = vector.broadcast %cst_20 : f32 to vector<4x1xf32>
      %cst_21 = arith.constant dense<0.000000e+00> : vector<4x4xf32>
      %23 = tpu.matmul %22, %20, %cst_21 {dimension_numbers = #tpu.dot_dimension_numbers<[1], [1], [0], [0], [0, 0, 1, 0], [], []>} : vector<4x1xf32>, vector<4x1xf32>, vector<4x4xf32> -> vector<4x4xf32>
      %cst_22 = arith.constant dense<0.000000e+00> : vector<4x4xf32>
      %24 = tpu.matmul %22, %21, %cst_22 {dimension_numbers = #tpu.dot_dimension_numbers<[1], [1], [0], [0], [0, 0, 1, 0], [], []>} : vector<4x1xf32>, vector<4x1xf32>, vector<4x4xf32> -> vector<4x4xf32>
      %25 = vector.broadcast %20 : vector<4x1xf32> to vector<4x4xf32>
      %26 = arith.subf %23, %25 : vector<4x4xf32>
      %cst_23 = arith.constant 1.000000e+06 : f32
      %27 = vector.broadcast %cst_23 : f32 to vector<4x4xf32>
      %28 = arith.mulf %26, %27 : vector<4x4xf32>
      %29 = arith.negf %28 : vector<4x4xf32>
      %30 = math.exp %29 : vector<4x4xf32>
      %cst_24 = arith.constant 1.000000e+00 : f32
      %31 = vector.broadcast %cst_24 : f32 to vector<4x4xf32>
      %32 = arith.addf %31, %30 : vector<4x4xf32>
      %33 = arith.divf %31, %32 : vector<4x4xf32>
      %34 = vector.broadcast %21 : vector<4x1xf32> to vector<4x4xf32>
      %35 = arith.subf %24, %34 : vector<4x4xf32>
      %36 = arith.negf %35 : vector<4x4xf32>
      %37 = math.exp %36 : vector<4x4xf32>
      %cst_25 = arith.constant 1.000000e+00 : f32
      %38 = vector.broadcast %cst_25 : f32 to vector<4x4xf32>
      %39 = arith.addf %38, %37 : vector<4x4xf32>
      %40 = arith.divf %38, %39 : vector<4x4xf32>
      %41 = arith.subf %33, %40 : vector<4x4xf32>
      %42 = arith.mulf %41, %41 : vector<4x4xf32>
      %cst_26 = arith.constant dense<0.000000e+00> : vector<4xf32>
      %43 = vector.multi_reduction <add>, %42, %cst_26 [1] : vector<4x4xf32> to vector<4xf32>
      %44 = vector.shape_cast %43 : vector<4xf32> to vector<4x1xf32>
      %cst_27 = arith.constant dense<0.000000e+00> : vector<1xf32>
      %45 = vector.multi_reduction <add>, %44, %cst_27 [0] : vector<4x1xf32> to vector<1xf32>
      %46 = vector.shape_cast %45 : vector<1xf32> to vector<1x1xf32>
      %cst_28 = arith.constant 6.250000e-02 : f32
      %47 = vector.broadcast %cst_28 : f32 to vector<1x1xf32>
      %48 = arith.mulf %46, %47 : vector<1x1xf32>
      %c0_29 = arith.constant 0 : index
      %c0_30 = arith.constant 0 : index
      %49 = vector.load %arg5[%c0_29, %c0_30] : memref<1x1xf32, #tpu.memory_space<vmem>>, vector<1x1xf32>
      tpu.vector_store %arg5[%c0_29, %c0_30], %48 {strides = array<i32>} : memref<1x1xf32, #tpu.memory_space<vmem>>, vector<1x1xf32>,
    } else {
    }
    return
  }
  func.func @transform_0(%arg0: i32) -> (i32, i32) {
    %c0_i32 = arith.constant 0 : i32
    %c0_i32_0 = arith.constant 0 : i32
    %c0_i32_1 = arith.constant 0 : i32
    return %c0_i32, %c0_i32_0 : i32, i32
  }
  func.func @transform_1(%arg0: i32) -> (i32, i32, i32) {
    %c0_i32 = arith.constant 0 : i32
    %c0_i32_0 = arith.constant 0 : i32
    %c0_i32_1 = arith.constant 0 : i32
    return %c0_i32, %arg0, %c0_i32_0 : i32, i32, i32
  }
  func.func @transform_2(%arg0: i32) -> (i32, i32, i32) {
    %c0_i32 = arith.constant 0 : i32
    %c0_i32_0 = arith.constant 0 : i32
    %c0_i32_1 = arith.constant 0 : i32
    return %c0_i32, %arg0, %c0_i32_0 : i32, i32, i32
  }
  func.func @transform_3(%arg0: i32) -> (i32, i32, i32) {
    %c0_i32 = arith.constant 0 : i32
    %c0_i32_0 = arith.constant 0 : i32
    %c0_i32_1 = arith.constant 0 : i32
    return %c0_i32, %arg0, %c0_i32_0 : i32, i32, i32
  }
  func.func @transform_4(%arg0: i32) -> (i32, i32) {
    %c0_i32 = arith.constant 0 : i32
    %c0_i32_0 = arith.constant 0 : i32
    %c0_i32_1 = arith.constant 0 : i32
    return %c0_i32, %c0_i32_0 : i32, i32
  }
}

</mosaic_0001>

<llo_original>
// kernel: custom_loss.1
$region0: #{custom_loss.1}
  #allocation0 [shape = 'u32[]', space=smem, size = 0x4, offset = 0x4, fixed_abs, tag = 'smem constant byte address 0x4 - core index']
  #allocation1 [shape = 'u32[144,128]{1,0:T(1,128)}', space=vmem, size = 0x12000, scoped, tag = 'internal scratch']
  #allocation2 [shape = 'f32[4,128]{1,0:T(4,128)}', space=vmem, size = 0x800, scoped, tag = 'scratch operand']
  %s0 = inlined_call_operand.vmem [shape: f32[4,1], index: 0, kind: input, shape index: {}]
  %s1 = inlined_call_operand.vmem [shape: f32[4,8,128], index: 1, kind: input, shape index: {}]
  %s2 = inlined_call_operand.vmem [shape: f32[4,8,128], index: 2, kind: input, shape index: {}]
  %s3 = inlined_call_operand.vmem [shape: f32[4,8,128], index: 3, kind: input, shape index: {}]
  %s4 = inlined_call_operand.hbm [shape: f32[1,1], index: 4, kind: output, shape index: {}]
  %s5 = sld [smem:[#allocation0]]
  $region34: #{custom_loss.1} parent=0
    _
  %s7 = ssub.s32 1, %s5
  %s8 = scalar_select 0, %s7, %s5
  $region1: #{custom_loss.1} parent=0
    #allocation3 [shape = 'u8[512]{0}', space=vmem, size = 0x400, scoped, tag = 'output window, operand 0, single buffered']
    #allocation4 [shape = 's32[1]{0}', space=sflag, size = 0x4, scoped, tag = 'scoped memory for custom_loss.1']
    %9 = vsyncpa [#allocation4], 0
    // Predicated region
    $region2: #{custom_loss.1} parent=1 // pred_check
      _
    $region3: #{custom_loss.1} parent=1 // pred_check_branch
      %11 = sbr.rel (0) target = $region5
    $region4: #{custom_loss.1} parent=1 // pred_region
      _
    $region5: #{custom_loss.1} parent=1 // pred_fallthru
      _
    // Predicated region
    $region6: #{custom_loss.1} parent=1 // pred_check
      _
    $region7: #{custom_loss.1} parent=1 // pred_check_branch
      %13 = sbr.rel (0) target = $region9
    $region8: #{custom_loss.1} parent=1 // pred_region
      _
    $region9: #{custom_loss.1} parent=1 // pred_fallthru
      _
    // Predicated region
    $region10: #{custom_loss.1} parent=1 // pred_check
      _
    $region11: #{custom_loss.1} parent=1 // pred_check_branch
      %15 = sbr.rel (0) target = $region13
    $region12: #{custom_loss.1} parent=1 // pred_region
      _
    $region13: #{custom_loss.1} parent=1 // pred_fallthru
      _
    // Predicated region
    $region14: #{custom_loss.1} parent=1 // pred_check
      _
    $region15: #{custom_loss.1} parent=1 // pred_check_branch
      %17 = sbr.rel (0) target = $region17
    $region16: #{custom_loss.1} parent=1 // pred_region
      _
    $region17: #{custom_loss.1} parent=1 // pred_fallthru
      _
    %p18 = scmp.eq.s32.totalorder 0, 0
    // Predicated region
    $region18: #{custom_loss.1} parent=1 // pred_check
      %p19 = pneg %p18
    $region19: #{custom_loss.1} parent=1 // pred_check_branch
      %21 = sbr.rel (%p19) target = $region21
    $region20: #{custom_loss.1} parent=1 // pred_region
      %22 = vst [vmem:[#allocation2] sm:$0xf] 0.0
    $region21: #{custom_loss.1} parent=1 // pred_fallthru
      _
    %v23 = vld [vmem:[%s3] sm:$0xff]
    %v24 = vld [vmem:[%s3 + $0x8] sm:$0xff]
    %v25 = vld [vmem:[%s3 + $0x10] sm:$0xff]
    %v26 = vld [vmem:[%s3 + $0x18] sm:$0xff]
    %v27 = vld [vmem:[%s1] sm:$0xff]
    %v28 = vld [vmem:[%s1 + $0x8] sm:$0xff]
    %v29 = vld [vmem:[%s1 + $0x10] sm:$0xff]
    %v30 = vld [vmem:[%s1 + $0x18] sm:$0xff]
    %v31 = vsub.f32 %v27, %v23
    %v32 = vsub.f32 %v28, %v24
    %v33 = vsub.f32 %v29, %v25
    %v34 = vsub.f32 %v30, %v26
    %v35 = vand.u32 2147483647, %v31
    %v36 = vand.u32 2147483647, %v32
    %v37 = vand.u32 2147483647, %v33
    %v38 = vand.u32 2147483647, %v34
    %v39 = vld [vmem:[%s2] sm:$0xff]
    %v40 = vld [vmem:[%s2 + $0x8] sm:$0xff]
    %v41 = vld [vmem:[%s2 + $0x10] sm:$0xff]
    %v42 = vld [vmem:[%s2 + $0x18] sm:$0xff]
    %v43 = vsub.f32 %v39, %v23
    %v44 = vsub.f32 %v40, %v24
    %v45 = vsub.f32 %v41, %v25
    %v46 = vsub.f32 %v42, %v26
    %v47 = vand.u32 2147483647, %v43
    %v48 = vand.u32 2147483647, %v44
    %v49 = vand.u32 2147483647, %v45
    %v50 = vand.u32 2147483647, %v46
    %v51 = vld [vmem:[#allocation2] sm:$0xf]
    %v52 = vsub.f32 %v47, %v35
    %v53 = vsub.f32 %v48, %v36
    %v54 = vsub.f32 %v49, %v37
    %v55 = vsub.f32 %v50, %v38
    %v56 = vrot.slane %v52, 4
    %v57 = vadd.f32 %v52, %v56
    %v58 = vrot.slane %v57, 2
    %v59 = vadd.f32 %v57, %v58
    %v60 = vrot.slane %v59, 1
    %v61 = vadd.f32 %v59, %v60
    %v62 = vrot.slane %v53, 4
    %v63 = vadd.f32 %v53, %v62
    %v64 = vrot.slane %v63, 2
    %v65 = vadd.f32 %v63, %v64
    %v66 = vrot.slane %v65, 1
    %v67 = vadd.f32 %v65, %v66
    %v68 = vrot.slane %v54, 4
    %v69 = vadd.f32 %v54, %v68
    %v70 = vrot.slane %v69, 2
    %v71 = vadd.f32 %v69, %v70
    %v72 = vrot.slane %v71, 1
    %v73 = vadd.f32 %v71, %v72
    %v74 = vrot.slane %v55, 4
    %v75 = vadd.f32 %v55, %v74
    %v76 = vrot.slane %v75, 2
    %v77 = vadd.f32 %v75, %v76
    %v78 = vrot.slane %v77, 1
    %v79 = vadd.f32 %v77, %v78
    %vm84 = vcmask 1041409
    %v85 = vsel %vm84, %v67, %v61
    %vm86 = vcmask 1042434
    %v87 = vsel %vm86, %v73, %v85
    %vm88 = vcmask 1043459
    %v89 = vsel %vm88, %v79, %v87
    %v91 = vadd.f32 %v51, %v89
    %92 = vst [vmem:[#allocation2] sm:$0xf] %v91
    // Predicated region
    $region22: #{custom_loss.1} parent=1 // pred_check
      %p93 = pneg %p18
    $region23: #{custom_loss.1} parent=1 // pred_check_branch
      %95 = sbr.rel (%p93) target = $region25
    $region24: #{custom_loss.1} parent=1 // pred_region
      %v96 = vld [vmem:[#allocation2] sm:$0xf]
      %vm97 = vcmask 1043456
      %v98 = vsel %vm97, %v96, 0.0
      %99 = vadd.xlane.f32.xlu0 %v98
      %v100 = vpop.xlane.xlu0 %99
      %v101 = vld [vmem:[%s0] sm:$0xf]
      %vm102 = vcmask 7168
      %v104 = vsel %vm102, 1.0, 0
      %v107 = vsel %vm102, %v100, 0
      %109 = vmatprep.subr.mxu0 0.0
      %110 = vmatpush1.xpose.msra.mxu0 0.0
      %111 = vmatprep.subr.mxu0 0.0
      %112 = vmatpush1.xpose.msra.mxu0 0.0
      %113 = vmatprep.subr.mxu0 0.0
      %114 = vmatpush1.xpose.msra.mxu0 0.0
      %115 = vmatprep.subr.mxu0 0.0
      %116 = vmatpush1.xpose.msra.mxu0 0.0
      %117 = vmatprep.subr.mxu0 0.0
      %118 = vmatpush1.xpose.msra.mxu0 0.0
      %119 = vmatprep.subr.mxu0 0.0
      %120 = vmatpush1.xpose.msra.mxu0 0.0
      %121 = vmatprep.subr.mxu0 0.0
      %122 = vmatpush1.xpose.msra.mxu0 0.0
      %123 = vmatprep.subr.mxu0 0.0
      %124 = vmatpush1.xpose.msra.mxu0 0.0
      %125 = vmatprep.subr.mxu0 0.0
      %126 = vmatpush1.xpose.msra.mxu0 0.0
      %127 = vmatprep.subr.mxu0 0.0
      %128 = vmatpush1.xpose.msra.mxu0 0.0
      %129 = vmatprep.subr.mxu0 0.0
      %130 = vmatpush1.xpose.msra.mxu0 0.0
      %131 = vmatprep.subr.mxu0 0.0
      %132 = vmatpush1.xpose.msra.mxu0 0.0
      %133 = vmatprep.subr.mxu0 0.0
      %134 = vmatpush1.xpose.msra.mxu0 0.0
      %135 = vmatprep.subr.mxu0 0.0
      %136 = vmatpush1.xpose.msra.mxu0 0.0
      %137 = vmatprep.subr.mxu0 0.0
      %138 = vmatpush1.xpose.msra.mxu0 0.0
      %139 = vmatprep.subr.mxu0 0.0
      %140 = vmatpush1.xpose.msra.mxu0 %v107
      %141 = vmatprep.subr.mxu0 0.0
      %142 = vmatpush2.xpose.msra.mxu0 0.0
      %143 = vmatprep.subr.mxu0 0.0
      %144 = vmatpush2.xpose.msra.mxu0 0.0
      %145 = vmatprep.subr.mxu0 0.0
      %146 = vmatpush2.xpose.msra.mxu0 0.0
      %147 = vmatprep.subr.mxu0 0.0
      %148 = vmatpush2.xpose.msra.mxu0 0.0
      %149 = vmatprep.subr.mxu0 0.0
      %150 = vmatpush2.xpose.msra.mxu0 0.0
      %151 = vmatprep.subr.mxu0 0.0
      %152 = vmatpush2.xpose.msra.mxu0 0.0
      %153 = vmatprep.subr.mxu0 0.0
      %154 = vmatpush2.xpose.msra.mxu0 0.0
      %155 = vmatprep.subr.mxu0 0.0
      %156 = vmatpush2.xpose.msra.mxu0 0.0
      %157 = vmatprep.subr.mxu0 0.0
      %158 = vmatpush2.xpose.msra.mxu0 0.0
      %159 = vmatprep.subr.mxu0 0.0
      %160 = vmatpush2.xpose.msra.mxu0 0.0
      %161 = vmatprep.subr.mxu0 0.0
      %162 = vmatpush2.xpose.msra.mxu0 0.0
      %163 = vmatprep.subr.mxu0 0.0
      %164 = vmatpush2.xpose.msra.mxu0 0.0
      %165 = vmatprep.subr.mxu0 0.0
      %166 = vmatpush2.xpose.msra.mxu0 0.0
      %167 = vmatprep.subr.mxu0 0.0
      %168 = vmatpush2.xpose.msra.mxu0 0.0
      %169 = vmatprep.subr.mxu0 0.0
      %170 = vmatpush2.xpose.msra.mxu0 0.0
      %171 = vmatprep.subr.mxu0 0.0
      %172 = vmatpush2.xpose.msra.mxu0 0.0
      %173 = vmatprep.mubr.f32.mxu0 0.0
      %174 = vmatmul.mubr.f32.gmra.mxu0 %v104
      %v175 = vpop.f32.mrf.mxu0
      %v176 = vadd.f32 0.0, %v175
      %v177 = vpop.f32.mrf.mxu0
      %178 = vdwg.mxu0
      %v180 = vsel %vm102, %v101, 0
      %182 = vmatprep.subr.mxu0 0.0
      %183 = vmatpush1.xpose.msra.mxu0 0.0
      %184 = vmatprep.subr.mxu0 0.0
      %185 = vmatpush1.xpose.msra.mxu0 0.0
      %186 = vmatprep.subr.mxu0 0.0
      %187 = vmatpush1.xpose.msra.mxu0 0.0
      %188 = vmatprep.subr.mxu0 0.0
      %189 = vmatpush1.xpose.msra.mxu0 0.0
      %190 = vmatprep.subr.mxu0 0.0
      %191 = vmatpush1.xpose.msra.mxu0 0.0
      %192 = vmatprep.subr.mxu0 0.0
      %193 = vmatpush1.xpose.msra.mxu0 0.0
      %194 = vmatprep.subr.mxu0 0.0
      %195 = vmatpush1.xpose.msra.mxu0 0.0
      %196 = vmatprep.subr.mxu0 0.0
      %197 = vmatpush1.xpose.msra.mxu0 0.0
      %198 = vmatprep.subr.mxu0 0.0
      %199 = vmatpush1.xpose.msra.mxu0 0.0
      %200 = vmatprep.subr.mxu0 0.0
      %201 = vmatpush1.xpose.msra.mxu0 0.0
      %202 = vmatprep.subr.mxu0 0.0
      %203 = vmatpush1.xpose.msra.mxu0 0.0
      %204 = vmatprep.subr.mxu0 0.0
      %205 = vmatpush1.xpose.msra.mxu0 0.0
      %206 = vmatprep.subr.mxu0 0.0
      %207 = vmatpush1.xpose.msra.mxu0 0.0
      %208 = vmatprep.subr.mxu0 0.0
      %209 = vmatpush1.xpose.msra.mxu0 0.0
      %210 = vmatprep.subr.mxu0 0.0
      %211 = vmatpush1.xpose.msra.mxu0 0.0
      %212 = vmatprep.subr.mxu0 0.0
      %213 = vmatpush1.xpose.msra.mxu0 %v180
      %214 = vmatprep.subr.mxu0 0.0
      %215 = vmatpush2.xpose.msra.mxu0 0.0
      %216 = vmatprep.subr.mxu0 0.0
      %217 = vmatpush2.xpose.msra.mxu0 0.0
      %218 = vmatprep.subr.mxu0 0.0
      %219 = vmatpush2.xpose.msra.mxu0 0.0
      %220 = vmatprep.subr.mxu0 0.0
      %221 = vmatpush2.xpose.msra.mxu0 0.0
      %222 = vmatprep.subr.mxu0 0.0
      %223 = vmatpush2.xpose.msra.mxu0 0.0
      %224 = vmatprep.subr.mxu0 0.0
      %225 = vmatpush2.xpose.msra.mxu0 0.0
      %226 = vmatprep.subr.mxu0 0.0
      %227 = vmatpush2.xpose.msra.mxu0 0.0
      %228 = vmatprep.subr.mxu0 0.0
      %229 = vmatpush2.xpose.msra.mxu0 0.0
      %230 = vmatprep.subr.mxu0 0.0
      %231 = vmatpush2.xpose.msra.mxu0 0.0
      %232 = vmatprep.subr.mxu0 0.0
      %233 = vmatpush2.xpose.msra.mxu0 0.0
      %234 = vmatprep.subr.mxu0 0.0
      %235 = vmatpush2.xpose.msra.mxu0 0.0
      %236 = vmatprep.subr.mxu0 0.0
      %237 = vmatpush2.xpose.msra.mxu0 0.0
      %238 = vmatprep.subr.mxu0 0.0
      %239 = vmatpush2.xpose.msra.mxu0 0.0
      %240 = vmatprep.subr.mxu0 0.0
      %241 = vmatpush2.xpose.msra.mxu0 0.0
      %242 = vmatprep.subr.mxu0 0.0
      %243 = vmatpush2.xpose.msra.mxu0 0.0
      %244 = vmatprep.subr.mxu0 0.0
      %245 = vmatpush2.xpose.msra.mxu0 0.0
      %246 = vmatprep.mubr.f32.mxu0 0.0
      %247 = vmatmul.mubr.f32.gmra.mxu0 %v104
      %v248 = vpop.f32.mrf.mxu0
      %v249 = vadd.f32 0.0, %v248
      %v250 = vpop.f32.mrf.mxu0
      %251 = vdwg.mxu0
      %v252 = vsub.f32 %v176, %v100
      %v253 = vmul.f32 %v252, 1000000.0
      %v254 = vxor.u32 %v253, 2147483648
      %v255 = vmul.f32 %v254, 1.442695
      %v256 = vpow.pop %v255
      %v257 = vadd.f32 %v256, 1.0
      %v258 = vrcp.pop %v257
      %v259 = vmul.f32 1.0, %v258
      %260 = vset.pattern.permute.xlu0 0
      %261 = vperm.xlu0 %260, %v101
      %v262 = vpop.permute.xlu0 %261
      %v264 = vsub.f32 %v249, %v262
      %v265 = vxor.u32 %v264, 2147483648
      %v266 = vmul.f32 %v265, 1.442695
      %v267 = vpow.pop %v266
      %v268 = vadd.f32 %v267, 1.0
      %v269 = vrcp.pop %v268
      %v270 = vmul.f32 1.0, %v269
      %v271 = vsub.f32 %v259, %v270
      %v272 = vmul.f32 %v271, %v271
      %vm273 = vcmask 27648
      %v274 = vsel %vm273, %v272, 0.0
      %275 = vadd.xlane.f32.xlu0 %v274
      %v276 = vpop.xlane.xlu0 %275
      %v277 = vsel %vm97, %v276, 0.0
      %v278 = vrot.slane %v277, 4
      %v279 = vadd.f32 %v277, %v278
      %v280 = vrot.slane %v279, 2
      %v281 = vadd.f32 %v279, %v280
      %v282 = vrot.slane %v281, 1
      %v283 = vadd.f32 %v281, %v282
      %v284 = vmul.f32 %v283, 0.0625
      %vm285 = vcmask 0
      %286 = vst.msk [vmem:[#allocation3] sm:$0x1] %vm285, %v284
    $region25: #{custom_loss.1} parent=1 // pred_fallthru
      _
    // Predicated region
    $region26: #{custom_loss.1} parent=1 // pred_check
      _
    $region27: #{custom_loss.1} parent=1 // pred_check_branch
      %288 = sbr.rel (0) target = $region29
    $region28: #{custom_loss.1} parent=1 // pred_region
      %s290 = ssub.s32 16, 16
      %291 = vsyncadd [#allocation4], %s290
      %s293 = sshll.u32 [#allocation3], 4
      %s294 = int_to_ptr.vmem [resolvable:$true] %s293
      %296 = dma.vmem_to_hbm [thread:$0]  %s294, 16, %s4, [#allocation4]
    $region29: #{custom_loss.1} parent=1 // pred_fallthru
      _
    // Predicated region
    $region30: #{custom_loss.1} parent=1 // pred_check
      _
    $region31: #{custom_loss.1} parent=1 // pred_check_branch
      %298 = sbr.rel (0) target = $region33
    $region32: #{custom_loss.1} parent=1 // pred_region
      %299 = dma.done [#allocation4], 16
    $region33: #{custom_loss.1} parent=1 // pred_fallthru
      _
    %300 = vsyncpa [#allocation4], 1

</llo_original>
